<compile_context>
chip_gen: v6e
topology: v6e:2x2x1
jax: 0.10.0
libtpu: 0.0.40
codegen_flags: <defaults>
</compile_context>

<pallas_src>
import functools

import jax
import jax.numpy as jnp
from jax.experimental import pallas as pl
from jax.experimental.pallas import tpu as pltpu


def _round_up(x, m):
    return (x + m - 1) // m * m


# ----------------------------------------------------------------------------
# One-time (import-scope) hardware / feature detection.
# ----------------------------------------------------------------------------
def _detect_hw():
    kind = ""
    try:
        kind = jax.devices()[0].device_kind.lower()
    except Exception:
        pass

    vmem_cap = None
    try:  # preferred: ask the runtime
        vmem_cap = int(pltpu.get_tpu_info().vmem_capacity_bytes)
    except Exception:
        vmem_cap = None
    if vmem_cap is None or vmem_cap <= 0:
        if "v7" in kind:
            vmem_cap = 64 << 20
        elif ("v4" in kind) or ("v5" in kind) or ("v6" in kind):
            vmem_cap = 128 << 20
        else:
            vmem_cap = 64 << 20          # conservative default

    # MXU N-width -> output/lane padding multiple.
    o_align = 256 if (("v6" in kind) or ("v7" in kind)) else 128
    # Bigger batch tiles pay off on 128 MiB chips (~85% of HBM roofline @512).
    target_tile_b = 512 if vmem_cap >= (128 << 20) else 256
    # Multi-TensorCore chips: make sure the "parallel" batch grid has >= 2 steps.
    prefer_multi_step = ("v7" in kind) or ("v4" in kind) or ("v5p" in kind)
    return vmem_cap, o_align, target_tile_b, prefer_multi_step


_VMEM_CAP, _O_ALIGN, _TARGET_TILE_B, _PREFER_MULTI_STEP = _detect_hw()
_H_ALIGN = 128


def _probe_buffered_support():
    """One-time compile probe for BlockSpec(pipeline_mode=pl.Buffered(1))."""
    if not hasattr(pl, "Buffered"):
        return False
    try:
        spec = pl.BlockSpec((8, 128), lambda i: (0, 0),
                            pipeline_mode=pl.Buffered(1))
    except (TypeError, AttributeError):
        return False
    try:
        def _k(x_ref, o_ref):
            o_ref[...] = x_ref[...] * 2.0

        fn = pl.pallas_call(
            _k,
            out_shape=jax.ShapeDtypeStruct((8, 128), jnp.float32),
            grid_spec=pltpu.PrefetchScalarGridSpec(
                num_scalar_prefetch=0,
                grid=(1,),
                in_specs=[spec],
                out_specs=pl.BlockSpec((8, 128), lambda i: (0, 0)),
            ),
        )
        jax.block_until_ready(fn(jnp.zeros((8, 128), jnp.float32)))
        return True
    except Exception:
        # Import-scope probe only; the hot path never falls back silently.
        return False


_HAS_BUFFERED = _probe_buffered_support()


# ----------------------------------------------------------------------------
# Kernel
# ----------------------------------------------------------------------------
def _linear_logsoftmax_kernel(x_ref, w_ref, b_ref, o_ref):
    # x_ref: (TB, H_pad)  w_ref: (H_pad, O_pad)  b_ref: (1, O_pad)  o_ref: (TB, O_pad)
    x = x_ref[...]
    w = w_ref[...]
    if x.dtype != w.dtype:
        # bf16 (or fp8) weights: run the MXU pass in the narrow dtype instead of
        # letting mixed-precision promotion re-expand the weight to f32.
        x = x.astype(w.dtype)
    logits = jnp.dot(x, w, preferred_element_type=jnp.float32)
    logits = logits + b_ref[...]                       # f32 bias; pad cols = -inf
    m = jnp.max(logits, axis=-1, keepdims=True)        # finite (real cols exist)
    shifted = logits - m
    lse = jnp.log(jnp.sum(jnp.exp(shifted), axis=-1, keepdims=True))
    o_ref[...] = (shifted - lse).astype(o_ref.dtype)


# ----------------------------------------------------------------------------
# One-time parameter prep (outside the hot path)
# ----------------------------------------------------------------------------
def prepare_params(weight, bias, *, compute_dtype=None, o_align=None,
                   h_align=_H_ALIGN):
    """weight: (O, H) (PyTorch nn.Linear layout);  bias: (O,).

    Returns w_t: (H_pad, O_pad) in compute_dtype (transposed, zero-padded) and
    b2: (1, O_pad) f32 with -inf in the padded columns (so they vanish in the
    logsumexp).  Pass compute_dtype=jnp.bfloat16 to halve the resident weight
    footprint; the kernel then runs the MXU pass in bf16 (f32 accumulation).
    """
    O, H = weight.shape
    o_align = o_align or _O_ALIGN
    O_pad = _round_up(O, o_align)
    H_pad = _round_up(H, h_align)
    w_dtype = jnp.dtype(compute_dtype) if compute_dtype is not None else weight.dtype
    w_t = jnp.zeros((H_pad, O_pad), dtype=w_dtype)
    w_t = w_t.at[:H, :O].set(weight.T.astype(w_dtype))
    b2 = jnp.full((1, O_pad), -jnp.inf, dtype=jnp.float32)
    b2 = b2.at[0, :O].set(bias.astype(jnp.float32))
    return w_t, b2


# ----------------------------------------------------------------------------
# pallas_call builder (cached) + tiling heuristics
# ----------------------------------------------------------------------------
def _max_tile_b(H_pad, O_pad, itm_x, itm_w, itm_o, n_wbuf, vmem_cap):
    budget = int(vmem_cap * 0.7)
    fixed = n_wbuf * (H_pad * O_pad * itm_w + O_pad * 4)      # resident weight+bias
    per_row = 2 * H_pad * itm_x + 2 * O_pad * itm_o + 2 * O_pad * 4
    avail = budget - fixed
    if avail <= per_row * 8:
        # TODO(synk): weight doesn't fit VMEM-resident -> needs the O-axis
        # online-logsumexp variant; fall back to the minimum tile here.
        return 8
    return max(8, (avail // per_row) // 8 * 8)


def _choose_tiling(B, target_tile, prefer_multi_step):
    """Pad B to a multiple of 8 only; bound padding waste to ~8*k rows."""
    B8 = _round_up(max(B, 1), 8)
    k = max(1, -(-B8 // target_tile))            # ceil(B8 / target_tile)
    if prefer_multi_step and B8 >= 16:
        k = max(k, 2)                            # feed both TensorCores
    tile_b = _round_up(-(-B8 // k), 8)           # round_up(ceil(B8/k), 8)
    B_pad = k * tile_b
    return tile_b, B_pad


@functools.lru_cache(maxsize=None)
def _build_call(B_pad, H_pad, O_pad, tile_b, x_dtype_name, w_dtype_name,
                out_dtype_name, single_buffer_weights):
    x_dtype = jnp.dtype(x_dtype_name)
    w_dtype = jnp.dtype(w_dtype_name)
    out_dtype = jnp.dtype(out_dtype_name)
    itm_x, itm_w, itm_o = x_dtype.itemsize, w_dtype.itemsize, out_dtype.itemsize
    n_wbuf = 1 if single_buffer_weights else 2

    # Explicit VMEM budget for one grid step (+50% headroom), clamped to the
    # detected chip capacity (v7x: 64 MiB, not the old hard 100 MiB cap).
    vmem_bytes = (2 * tile_b * H_pad * itm_x          # x tile, double-buffered
                  + n_wbuf * H_pad * O_pad * itm_w    # weight, resident
                  + n_wbuf * O_pad * 4                # bias
                  + 2 * tile_b * O_pad * itm_o        # out tile, double-buffered
                  + 2 * tile_b * O_pad * 4)           # f32 logits / softmax temps
    vmem_limit = min(max(int(vmem_bytes * 1.5) + (1 << 20), 32 << 20),
                     int(_VMEM_CAP * 0.9))

    w_kwargs = dict(pipeline_mode=pl.Buffered(1)) if single_buffer_weights else {}

    cost = pl.CostEstimate(
        flops=2 * B_pad * H_pad * O_pad,
        transcendentals=B_pad * (O_pad + 1),          # exp per column + log per row
        bytes_accessed=(B_pad * H_pad * itm_x + H_pad * O_pad * itm_w
                        + O_pad * 4 + B_pad * O_pad * itm_o),
    )

    return pl.pallas_call(
        _linear_logsoftmax_kernel,
        out_shape=jax.ShapeDtypeStruct((B_pad, O_pad), out_dtype),
        grid_spec=pltpu.PrefetchScalarGridSpec(
            num_scalar_prefetch=0,
            grid=(B_pad // tile_b,),
            in_specs=[
                pl.BlockSpec((tile_b, H_pad), lambda i: (i, 0)),
                pl.BlockSpec((H_pad, O_pad), lambda i: (0, 0), **w_kwargs),
                pl.BlockSpec((1, O_pad), lambda i: (0, 0), **w_kwargs),
            ],
            out_specs=pl.BlockSpec((tile_b, O_pad), lambda i: (i, 0)),
        ),
        compiler_params=pltpu.CompilerParams(
            dimension_semantics=("parallel",),        # batch tiles -> both TCs
            vmem_limit_bytes=vmem_limit,
        ),
        cost_estimate=cost,
    )


# ----------------------------------------------------------------------------
# Hot path
# ----------------------------------------------------------------------------
@functools.partial(jax.jit, static_argnames=("output_size", "out_dtype", "tile_b"))
def log_softmax_out(x, w_t, b2, output_size, *, out_dtype=None, tile_b=None):
    """log_softmax(x @ W + b, axis=-1).  x: (..., H) -> (..., output_size)."""
    orig_shape = x.shape
    H = orig_shape[-1]
    x2 = x.reshape(-1, H)
    B = x2.shape[0]
    H_pad, O_pad = w_t.shape
    assert H <= H_pad, "hidden dim larger than prepared weight"
    out_dt = jnp.dtype(out_dtype) if out_dtype is not None else jnp.dtype(x.dtype)

    n_wbuf = 1 if _HAS_BUFFERED else 2
    itm_x = jnp.dtype(x.dtype).itemsize
    itm_w = jnp.dtype(w_t.dtype).itemsize

    if tile_b is None:
        cap_tile = _max_tile_b(H_pad, O_pad, itm_x, itm_w, out_dt.itemsize,
                               n_wbuf, _VMEM_CAP)
        target = min(_TARGET_TILE_B, cap_tile)
    else:
        target = max(8, _round_up(int(tile_b), 8))

    tb, B_pad = _choose_tiling(B, target, _PREFER_MULTI_STEP)

    pad_b, pad_h = B_pad - B, H_pad - H
    x_p = jnp.pad(x2, ((0, pad_b), (0, pad_h))) if (pad_b or pad_h) else x2

    fn = _build_call(B_pad, H_pad, O_pad, tb,
                     jnp.dtype(x.dtype).name, jnp.dtype(w_t.dtype).name,
                     out_dt.name, _HAS_BUFFERED)
    out_p = fn(x_p, w_t, b2)
    out = out_p[:B, :output_size]
    return out.reshape(orig_shape[:-1] + (output_size,))


def _reference(x, weight, bias):
    return jax.nn.log_softmax(x @ weight.T + bias, axis=-1)


if __name__ == "__main__":
    key = jax.random.PRNGKey(0)
    B, H, O = 8, 32, 16   # batch, hidden_size, output_size

    kx, kw, kb = jax.random.split(key, 3)
    x = jax.random.normal(kx, (B, H), dtype=jnp.float32)
    # deterministic parameter init (mimics nn.Linear uniform init scale)
    bound = 1.0 / (H ** 0.5)
    weight = jax.random.uniform(kw, (O, H), minval=-bound, maxval=bound,
                                dtype=jnp.float32)
    bias = jax.random.uniform(kb, (O,), minval=-bound, maxval=bound,
                              dtype=jnp.float32)

    ref = _reference(x, weight, bias)

    # f32 path (reference-accurate)
    w_t, b2 = prepare_params(weight, bias)
    out = jax.block_until_ready(log_softmax_out(x, w_t, b2, O))
    assert out.shape == (B, O)
    assert jnp.allclose(out, ref, atol=1e-5, rtol=1e-5), "f32 mismatch vs reference"

    # bf16-weight fast path (x tile cast to bf16 in-kernel, f32 accumulation)
    w_t16, b2_16 = prepare_params(weight, bias, compute_dtype=jnp.bfloat16)
    out16 = jax.block_until_ready(log_softmax_out(x, w_t16, b2_16, O))
    assert out16.shape == (B, O)
    assert jnp.allclose(out16, ref, atol=5e-2, rtol=5e-2), "bf16 path diverged"

    print("KERNEL_OK")
</pallas_src>

<mosaic_0001>
module attributes {stable_mosaic.version = 11 : i64} {
  func.func @_k(%arg0: i32, %arg1: memref<8x128xf32, #tpu.memory_space<vmem>>, %arg2: memref<8x128xf32, #tpu.memory_space<vmem>>) attributes {dimension_semantics = [#tpu.dimension_semantics<arbitrary>], iteration_bounds = array<i64: 1>, scalar_prefetch = 0 : i64, scratch_operands = 0 : i64, tpu.core_type = #tpu.core_type<tc>, window_params = [{pipeline_mode = #tpu.pipeline_mode<synchronous>, transform_indices = @transform_0, window_bounds = array<i64: 8, 128>}, {pipeline_mode = #tpu.pipeline_mode<synchronous>, transform_indices = @transform_1, window_bounds = array<i64: 8, 128>}]} {
    %c0 = arith.constant 0 : index
    %c0_0 = arith.constant 0 : index
    %0 = vector.load %arg1[%c0, %c0_0] : memref<8x128xf32, #tpu.memory_space<vmem>>, vector<8x128xf32>
    %cst = arith.constant 2.000000e+00 : f32
    %1 = vector.broadcast %cst : f32 to vector<8x128xf32>
    %2 = arith.mulf %0, %1 : vector<8x128xf32>
    %c0_1 = arith.constant 0 : index
    %c0_2 = arith.constant 0 : index
    %3 = vector.load %arg2[%c0_1, %c0_2] : memref<8x128xf32, #tpu.memory_space<vmem>>, vector<8x128xf32>
    tpu.vector_store %arg2[%c0_1, %c0_2], %2 {strides = array<i32>} : memref<8x128xf32, #tpu.memory_space<vmem>>, vector<8x128xf32>,
    return
  }
  func.func @transform_0(%arg0: i32) -> (i32, i32) {
    %c0_i32 = arith.constant 0 : i32
    %c0_i32_0 = arith.constant 0 : i32
    %c0_i32_1 = arith.constant 0 : i32
    return %c0_i32, %c0_i32_0 : i32, i32
  }
  func.func @transform_1(%arg0: i32) -> (i32, i32) {
    %c0_i32 = arith.constant 0 : i32
    %c0_i32_0 = arith.constant 0 : i32
    %c0_i32_1 = arith.constant 0 : i32
    return %c0_i32, %c0_i32_0 : i32, i32
  }
}

module attributes {stable_mosaic.version = 11 : i64} {
  func.func @_linear_logsoftmax_kernel(%arg0: i32, %arg1: memref<8x128xf32, #tpu.memory_space<vmem>>, %arg2: memref<128x128xf32, #tpu.memory_space<vmem>>, %arg3: memref<1x128xf32, #tpu.memory_space<vmem>>, %arg4: memref<8x128xf32, #tpu.memory_space<vmem>>) attributes {dimension_semantics = [#tpu.dimension_semantics<parallel>], iteration_bounds = array<i64: 1>, scalar_prefetch = 0 : i64, scratch_operands = 0 : i64, tpu.core_type = #tpu.core_type<tc>, window_params = [{transform_indices = @transform_0, window_bounds = array<i64: 8, 128>}, {pipeline_mode = #tpu.pipeline_mode<synchronous>, transform_indices = @transform_1, window_bounds = array<i64: 128, 128>}, {pipeline_mode = #tpu.pipeline_mode<synchronous>, transform_indices = @transform_2, window_bounds = array<i64: 1, 128>}, {transform_indices = @transform_3, window_bounds = array<i64: 8, 128>}]} {
    %c0 = arith.constant 0 : index
    %c0_0 = arith.constant 0 : index
    %0 = vector.load %arg1[%c0, %c0_0] : memref<8x128xf32, #tpu.memory_space<vmem>>, vector<8x128xf32>
    %c0_1 = arith.constant 0 : index
    %c0_2 = arith.constant 0 : index
    %1 = vector.load %arg2[%c0_1, %c0_2] : memref<128x128xf32, #tpu.memory_space<vmem>>, vector<128x128xf32>
    %cst = arith.constant dense<0.000000e+00> : vector<8x128xf32>
    %2 = tpu.matmul %0, %1, %cst {dimension_numbers = #tpu.dot_dimension_numbers<[1], [0], [0], [1], [0, 0, 1, 1], [], []>} : vector<8x128xf32>, vector<128x128xf32>, vector<8x128xf32> -> vector<8x128xf32>
    %c0_3 = arith.constant 0 : index
    %c0_4 = arith.constant 0 : index
    %3 = vector.load %arg3[%c0_3, %c0_4] : memref<1x128xf32, #tpu.memory_space<vmem>>, vector<1x128xf32>
    %4 = vector.broadcast %3 : vector<1x128xf32> to vector<8x128xf32>
    %5 = arith.addf %2, %4 : vector<8x128xf32>
    %cst_5 = arith.constant dense<0xFF800000> : vector<8xf32>
    %6 = vector.multi_reduction <maximumf>, %5, %cst_5 [1] : vector<8x128xf32> to vector<8xf32>
    %7 = vector.shape_cast %6 : vector<8xf32> to vector<8x1xf32>
    %8 = vector.broadcast %7 : vector<8x1xf32> to vector<8x128xf32>
    %9 = arith.subf %5, %8 : vector<8x128xf32>
    %10 = math.exp %9 : vector<8x128xf32>
    %cst_6 = arith.constant dense<0.000000e+00> : vector<8xf32>
    %11 = vector.multi_reduction <add>, %10, %cst_6 [1] : vector<8x128xf32> to vector<8xf32>
    %12 = vector.shape_cast %11 : vector<8xf32> to vector<8x1xf32>
    %13 = math.log %12 : vector<8x1xf32>
    %14 = vector.broadcast %13 : vector<8x1xf32> to vector<8x128xf32>
    %15 = arith.subf %9, %14 : vector<8x128xf32>
    %c0_7 = arith.constant 0 : index
    %c0_8 = arith.constant 0 : index
    %16 = vector.load %arg4[%c0_7, %c0_8] : memref<8x128xf32, #tpu.memory_space<vmem>>, vector<8x128xf32>
    tpu.vector_store %arg4[%c0_7, %c0_8], %15 {strides = array<i32>} : memref<8x128xf32, #tpu.memory_space<vmem>>, vector<8x128xf32>,
    return
  }
  func.func @transform_0(%arg0: i32) -> (i32, i32) {
    %c0_i32 = arith.constant 0 : i32
    %c0_i32_0 = arith.constant 0 : i32
    return %arg0, %c0_i32 : i32, i32
  }
  func.func @transform_1(%arg0: i32) -> (i32, i32) {
    %c0_i32 = arith.constant 0 : i32
    %c0_i32_0 = arith.constant 0 : i32
    %c0_i32_1 = arith.constant 0 : i32
    return %c0_i32, %c0_i32_0 : i32, i32
  }
  func.func @transform_2(%arg0: i32) -> (i32, i32) {
    %c0_i32 = arith.constant 0 : i32
    %c0_i32_0 = arith.constant 0 : i32
    %c0_i32_1 = arith.constant 0 : i32
    return %c0_i32, %c0_i32_0 : i32, i32
  }
  func.func @transform_3(%arg0: i32) -> (i32, i32) {
    %c0_i32 = arith.constant 0 : i32
    %c0_i32_0 = arith.constant 0 : i32
    return %arg0, %c0_i32 : i32, i32
  }
}

</mosaic_0001>

<llo_original>
// kernel: tpu_custom_call.1
$region0: #{tpu_custom_call.1}
  #allocation0 [shape = 'u32[]', space=smem, size = 0x4, offset = 0x4, fixed_abs, tag = 'smem constant byte address 0x4 - core index']
  #allocation1 [shape = 'u32[144,128]{1,0:T(1,128)}', space=vmem, size = 0x12000, scoped, tag = 'internal scratch']
  %s0 = inlined_call_operand.hbm [shape: f32[8,128], index: 0, kind: input, shape index: {}]
  %s1 = inlined_call_operand.hbm [shape: f32[8,128], index: 1, kind: output, shape index: {}]
  %s2 = sld [smem:[#allocation0]]
  $region18: #{tpu_custom_call.1} parent=0
    _
  %s4 = ssub.s32 1, %s2
  %s5 = scalar_select 0, %s4, %s2
  $region1: #{tpu_custom_call.1} parent=0
    #allocation2 [shape = 'u8[4096]{0}', space=vmem, size = 0x1000, scoped, tag = 'input window, operand 0, single buffered']
    #allocation3 [shape = 's32[1]{0}', space=sflag, size = 0x4, scoped, tag = 'scoped memory for tpu_custom_call.1']
    #allocation4 [shape = 's32[1]{0}', space=sflag, size = 0x4, scoped, tag = 'scoped memory for tpu_custom_call.1']
    #allocation5 [shape = 'u8[4096]{0}', space=vmem, size = 0x1000, scoped, tag = 'output window, operand 0, single buffered']
    %6 = vsyncpa [#allocation3], 0
    %7 = vsyncpa [#allocation4], 0
    // Predicated region
    $region2: #{tpu_custom_call.1} parent=1 // pred_check
      _
    $region3: #{tpu_custom_call.1} parent=1 // pred_check_branch
      %9 = sbr.rel (0) target = $region5
    $region4: #{tpu_custom_call.1} parent=1 // pred_region
      %s11 = ssub.s32 128, 128
      %12 = vsyncadd [#allocation3], %s11
      %s14 = sshll.u32 [#allocation2], 4
      %s15 = int_to_ptr.vmem [resolvable:$true] %s14
      %17 = dma.hbm_to_vmem [thread:$0]  %s0, 128, %s15, [#allocation3]
    $region5: #{tpu_custom_call.1} parent=1 // pred_fallthru
      _
    // Predicated region
    $region6: #{tpu_custom_call.1} parent=1 // pred_check
      _
    $region7: #{tpu_custom_call.1} parent=1 // pred_check_branch
      %19 = sbr.rel (0) target = $region9
    $region8: #{tpu_custom_call.1} parent=1 // pred_region
      %20 = dma.done [#allocation3], 128
    $region9: #{tpu_custom_call.1} parent=1 // pred_fallthru
      _
    %v21 = vld [vmem:[#allocation2] sm:$0xff]
    %v22 = vmul.f32 %v21, 2.0
    %23 = vst [vmem:[#allocation5] sm:$0xff] %v22
    // Predicated region
    $region10: #{tpu_custom_call.1} parent=1 // pred_check
      _
    $region11: #{tpu_custom_call.1} parent=1 // pred_check_branch
      %25 = sbr.rel (0) target = $region13
    $region12: #{tpu_custom_call.1} parent=1 // pred_region
      %s27 = ssub.s32 128, 128
      %28 = vsyncadd [#allocation4], %s27
      %s30 = sshll.u32 [#allocation5], 4
      %s31 = int_to_ptr.vmem [resolvable:$true] %s30
      %33 = dma.vmem_to_hbm [thread:$0]  %s31, 128, %s1, [#allocation4]
    $region13: #{tpu_custom_call.1} parent=1 // pred_fallthru
      _
    // Predicated region
    $region14: #{tpu_custom_call.1} parent=1 // pred_check
      _
    $region15: #{tpu_custom_call.1} parent=1 // pred_check_branch
      %35 = sbr.rel (0) target = $region17
    $region16: #{tpu_custom_call.1} parent=1 // pred_region
      %36 = dma.done [#allocation4], 128
    $region17: #{tpu_custom_call.1} parent=1 // pred_fallthru
      _
    %37 = vsyncpa [#allocation3], 1
    %38 = vsyncpa [#allocation4], 1

</llo_original>
